<compile_context>
chip_gen: v6e
topology: v6e:2x2x1
jax: 0.10.0
libtpu: 0.0.40
codegen_flags: <defaults>
</compile_context>

<pallas_src>
import functools

import jax
import jax.numpy as jnp
from jax.experimental import pallas as pl
from jax.experimental.pallas import tpu as pltpu


# --------------------------- Model configuration --------------------------- #

H_LEVEL = 2              # number of hierarchy-level encoders
N_HIDDEN = 32            # cf.n_hidden
STUDENT_LAYER = 2        # cf.student_layer
D = N_HIDDEN // H_LEVEL  # 16 = project_dim (dim_align=1, JK='last')
D_TOT = H_LEVEL * D      # 32: both encoders batched along the feature axis
E_TILE = 256             # edge tile (lane width of the one-hot blocks)

NUM_ATOM_TYPE = 120
NUM_CHIRALITY = 3
NUM_BOND_TYPE = 6        # self-loop bond type id = 4
NUM_BOND_DIR = 3
BN_EPS = 1e-5

_TRANS_B = (((1,), (1,)), ((), ()))   # lhs @ rhs^T dimension numbers


def _round_up(x, m):
    return ((x + m - 1) // m) * m


# ------------------------------ Pallas kernel ------------------------------ #

def _mgse_fused_kernel(src_ref, dst_ref, batch_ref, h0_ref, ee_ref,
                       w1_ref, w2_ref, bias_ref, out_ref,
                       *, n_layers, n_e_tiles, e_tile, d_tot, g_pad):
    """Fused [all encoders x all GIN layers x mean-pool] forward (single call).

    src_ref   : [1, E_pad]   int32    message source node per edge
    dst_ref   : [1, E_pad]   int32    message dest node per edge (pad = -1)
    batch_ref : [1, N_pad]   int32    graph id per node (pad = -1)
    h0_ref    : [N_pad, D_TOT]        initial atom embeddings (both encoders)
    ee_ref    : [SL, E_pad, D_TOT]    per-layer edge embeddings
    w1_ref    : [SL, D_TOT, 2*D_TOT]  block-diagonal GIN MLP Linear-1
    w2_ref    : [SL, 2*D_TOT, D_TOT]  block-diagonal Linear-2 with BN folded in
    bias_ref  : [SL, 2, 2*D_TOT]      row0 = b1, row1[:D_TOT] = b2 (BN folded)
    out_ref   : [G_pad, D_TOT]        pooled graph embeddings (both encoders)
    """
    n_pad = h0_ref.shape[0]

    src = src_ref[...]                 # (1, E_pad) int32
    dst = dst_ref[...]                 # (1, E_pad) int32 (pad = -1)
    ee = ee_ref[...]                   # (SL, E_pad, D_TOT) f32

    # ---- Single pass over edge tiles (layer-invariant structure): build the
    # dense adjacency A[d, s] = #edges s->d (incl. self loops) and the per-layer
    # scatter-added edge embeddings.  One sublane iota per tile; both one-hots
    # share the (n_pad, E_TILE) orientation (edges on the 128-lane axis);
    # compare-and-cast instead of f32 select.  Padded edges have dst = -1, so
    # their one-hot column is all zeros and they contribute nothing.
    node_iota = jax.lax.broadcasted_iota(jnp.int32, (n_pad, e_tile), 0)
    adj = jnp.zeros((n_pad, n_pad), jnp.float32)
    ee_agg = [jnp.zeros((n_pad, d_tot), jnp.float32) for _ in range(n_layers)]
    for t in range(n_e_tiles):
        sl = slice(t * e_tile, (t + 1) * e_tile)
        src_oh = (node_iota == src[:, sl]).astype(jnp.float32)   # [n, j] = (src[j]==n)
        dst_oh = (node_iota == dst[:, sl]).astype(jnp.float32)   # [n, j] = (dst[j]==n)
        # A += dst_oh @ src_oh^T   (contraction over the edge/lane axis)
        adj = adj + jax.lax.dot_general(dst_oh, src_oh, _TRANS_B,
                                        preferred_element_type=jnp.float32)
        for l in range(n_layers):
            ee_agg[l] = ee_agg[l] + jnp.dot(dst_oh, ee[l, sl],
                                            preferred_element_type=jnp.float32)

    # ---- Layer loop (unrolled in-kernel, no grid): GIN aggregate + MLP with
    # eval-mode BatchNorm folded into W2/b2.  Everything stays f32 end-to-end.
    h = h0_ref[...]
    for l in range(n_layers):
        bias = bias_ref[l]                                        # (2, 2*D_TOT)
        aggr = jnp.dot(adj, h, preferred_element_type=jnp.float32) + ee_agg[l]
        hid = jnp.maximum(
            jnp.dot(aggr, w1_ref[l], preferred_element_type=jnp.float32)
            + bias[0:1, :], 0.0)
        h = (jnp.dot(hid, w2_ref[l], preferred_element_type=jnp.float32)
             + bias[1:2, :d_tot])
        if l != n_layers - 1:
            h = jnp.maximum(h, 0.0)
        # TODO(synk): dropout is identity in eval mode; training-mode dropout not emitted.

    # ---- Fused global_mean_pool (padded nodes carry batch id -1 -> excluded).
    pool = (jax.lax.broadcasted_iota(jnp.int32, (g_pad, n_pad), 0)
            == batch_ref[...]).astype(jnp.float32)
    counts = jnp.maximum(jnp.sum(pool, axis=1, keepdims=True), 1.0)
    out_ref[...] = (jnp.dot(pool, h, preferred_element_type=jnp.float32)
                    / counts).astype(out_ref.dtype)


# ------------------------------ Parameter init ----------------------------- #

def _xavier_uniform(key, shape):
    fan_in, fan_out = shape[0], shape[1]
    bound = (6.0 / (fan_in + fan_out)) ** 0.5
    return jax.random.uniform(key, shape, jnp.float32, -bound, bound)


def init_params(key):
    params = []
    for _ in range(H_LEVEL):
        key, k1, k2 = jax.random.split(key, 3)
        enc = {
            "atom_emb1": _xavier_uniform(k1, (NUM_ATOM_TYPE, D)),
            "atom_emb2": _xavier_uniform(k2, (NUM_CHIRALITY, D)),
            "layers": [],
        }
        for _ in range(STUDENT_LAYER):
            key, ke1, ke2, kw1, kw2 = jax.random.split(key, 5)
            enc["layers"].append({
                "edge_emb1": _xavier_uniform(ke1, (NUM_BOND_TYPE, D)),
                "edge_emb2": _xavier_uniform(ke2, (NUM_BOND_DIR, D)),
                "W1": _xavier_uniform(kw1, (D, 2 * D)),
                "b1": jnp.zeros((2 * D,), jnp.float32),
                "W2": _xavier_uniform(kw2, (2 * D, D)),
                "b2": jnp.zeros((D,), jnp.float32),
                "bn_gamma": jnp.ones((D,), jnp.float32),
                "bn_beta": jnp.zeros((D,), jnp.float32),
                "bn_mean": jnp.zeros((D,), jnp.float32),
                "bn_var": jnp.ones((D,), jnp.float32),
            })
        params.append(enc)
    return params


# --------------------------- Host-side param packing ------------------------ #

def _pack_parameters(params):
    """Fold BN (eval) into W2/b2 and batch the H_LEVEL encoders block-diagonally."""
    w1_l, w2_l, bias_l = [], [], []
    for layer in range(STUDENT_LAYER):
        w1_bd = jnp.zeros((D_TOT, 2 * D_TOT), jnp.float32)
        w2_bd = jnp.zeros((2 * D_TOT, D_TOT), jnp.float32)
        b1_cat = jnp.zeros((2 * D_TOT,), jnp.float32)
        b2_cat = jnp.zeros((D_TOT,), jnp.float32)
        for k, enc in enumerate(params):
            lp = enc["layers"][layer]
            scale = lp["bn_gamma"] / jnp.sqrt(lp["bn_var"] + BN_EPS)
            shift = lp["bn_beta"] - lp["bn_mean"] * scale
            w1_bd = w1_bd.at[k * D:(k + 1) * D, k * 2 * D:(k + 1) * 2 * D].set(lp["W1"])
            w2_bd = w2_bd.at[k * 2 * D:(k + 1) * 2 * D, k * D:(k + 1) * D].set(
                lp["W2"] * scale[None, :])
            b1_cat = b1_cat.at[k * 2 * D:(k + 1) * 2 * D].set(lp["b1"])
            b2_cat = b2_cat.at[k * D:(k + 1) * D].set(lp["b2"] * scale + shift)
        bias_pack = jnp.zeros((2, 2 * D_TOT), jnp.float32)
        bias_pack = bias_pack.at[0, :].set(b1_cat)
        bias_pack = bias_pack.at[1, :D_TOT].set(b2_cat)
        w1_l.append(w1_bd)
        w2_l.append(w2_bd)
        bias_l.append(bias_pack)
    return jnp.stack(w1_l), jnp.stack(w2_l), jnp.stack(bias_l)


# ------------------------------ Forward pass ------------------------------- #

def student_model_forward(params, x, edge_index, edge_attr, batch, n_graphs):
    n_nodes = x.shape[0]
    n_pad = _round_up(max(n_nodes, 8), 8)
    g_pad = _round_up(max(n_graphs, 8), 8)

    # add self loops (bond type 4, direction 0) as in GINConv.forward
    loop_idx = jnp.arange(n_nodes, dtype=jnp.int32)
    src = jnp.concatenate([edge_index[0], loop_idx])
    dst = jnp.concatenate([edge_index[1], loop_idx])
    loop_attr = jnp.stack(
        [jnp.full((n_nodes,), 4, jnp.int32), jnp.zeros((n_nodes,), jnp.int32)], axis=1)
    ea = jnp.concatenate([edge_attr, loop_attr], axis=0)

    e_tot = src.shape[0]
    e_pad = _round_up(max(e_tot, E_TILE), E_TILE)
    n_e_tiles = e_pad // E_TILE

    # padded index vectors; padding edges get dst = -1 -> scatter nowhere,
    # padding nodes get batch = -1 -> excluded from the pool.
    src_p = jnp.zeros((e_pad,), jnp.int32).at[:e_tot].set(src).reshape(1, e_pad)
    dst_p = jnp.full((e_pad,), -1, jnp.int32).at[:e_tot].set(dst).reshape(1, e_pad)
    batch_p = jnp.full((n_pad,), -1, jnp.int32).at[:n_nodes].set(batch).reshape(1, n_pad)

    # embedding-table gathers (JAX glue), both encoders concatenated on features
    h0 = jnp.concatenate(
        [enc["atom_emb1"][x[:, 0]] + enc["atom_emb2"][x[:, 1]] for enc in params], axis=1)
    h0 = jnp.zeros((n_pad, D_TOT), jnp.float32).at[:n_nodes].set(h0)

    ee_layers = []
    for layer in range(STUDENT_LAYER):
        ee = jnp.concatenate(
            [enc["layers"][layer]["edge_emb1"][ea[:, 0]]
             + enc["layers"][layer]["edge_emb2"][ea[:, 1]] for enc in params], axis=1)
        ee_layers.append(jnp.zeros((e_pad, D_TOT), jnp.float32).at[:e_tot].set(ee))
    ee_stack = jnp.stack(ee_layers)                    # [SL, E_pad, D_TOT]

    w1, w2, bias = _pack_parameters(params)            # [SL, ...] each

    kernel = functools.partial(
        _mgse_fused_kernel, n_layers=STUDENT_LAYER, n_e_tiles=n_e_tiles,
        e_tile=E_TILE, d_tot=D_TOT, g_pad=g_pad)

    vmem_spec = lambda: pl.BlockSpec(memory_space=pltpu.MemorySpace.VMEM)

    # Single kernel invocation, no grid: every operand is a full-array VMEM
    # block (total footprint well under 1 MiB), all loops live inside the body.
    g_all = pl.pallas_call(
        kernel,
        out_shape=jax.ShapeDtypeStruct((g_pad, D_TOT), jnp.float32),
        in_specs=[vmem_spec() for _ in range(8)],
        out_specs=vmem_spec(),
    )(src_p, dst_p, batch_p, h0, ee_stack, w1, w2, bias)

    g_all = g_all[:n_graphs]
    # split the lane-dense [G, H_LEVEL*D] slab back into the module's g_list
    return [g_all[:, k * D:(k + 1) * D] for k in range(H_LEVEL)]


# ---------------------------------- Main ----------------------------------- #

if __name__ == "__main__":
    key = jax.random.PRNGKey(0)
    kp, kx0, kx1, ks, kd, ke0, ke1 = jax.random.split(key, 7)

    # 120 edges + 24 self-loops = 144 -> padded to one 256-wide edge tile.
    N_NODES, N_EDGES, N_GRAPHS = 24, 120, 3

    params = init_params(kp)

    # node features: [atom type, chirality tag]
    x = jnp.stack(
        [jax.random.randint(kx0, (N_NODES,), 0, NUM_ATOM_TYPE, dtype=jnp.int32),
         jax.random.randint(kx1, (N_NODES,), 0, NUM_CHIRALITY, dtype=jnp.int32)], axis=1)
    # directed edges
    edge_index = jnp.stack(
        [jax.random.randint(ks, (N_EDGES,), 0, N_NODES, dtype=jnp.int32),
         jax.random.randint(kd, (N_EDGES,), 0, N_NODES, dtype=jnp.int32)], axis=0)
    # edge features: [bond type (0..3), bond direction]
    edge_attr = jnp.stack(
        [jax.random.randint(ke0, (N_EDGES,), 0, 4, dtype=jnp.int32),
         jax.random.randint(ke1, (N_EDGES,), 0, NUM_BOND_DIR, dtype=jnp.int32)], axis=1)
    # graph assignment: 3 graphs of 8 nodes each
    batch = jnp.repeat(jnp.arange(N_GRAPHS, dtype=jnp.int32), N_NODES // N_GRAPHS)

    g_list = student_model_forward(params, x, edge_index, edge_attr, batch, N_GRAPHS)
    g_list = [jax.block_until_ready(g) for g in g_list]

    assert len(g_list) == H_LEVEL
    for g in g_list:
        assert g.shape == (N_GRAPHS, D)
        assert bool(jnp.all(jnp.isfinite(g)))
    print("KERNEL_OK")
</pallas_src>

<mosaic_0001>
module attributes {stable_mosaic.version = 11 : i64} {
  func.func @_mgse_fused_kernel(%arg0: memref<1x256xi32, #tpu.memory_space<vmem>>, %arg1: memref<1x256xi32, #tpu.memory_space<vmem>>, %arg2: memref<1x24xi32, #tpu.memory_space<vmem>>, %arg3: memref<24x32xf32, #tpu.memory_space<vmem>>, %arg4: memref<2x256x32xf32, #tpu.memory_space<vmem>>, %arg5: memref<2x32x64xf32, #tpu.memory_space<vmem>>, %arg6: memref<2x64x32xf32, #tpu.memory_space<vmem>>, %arg7: memref<2x2x64xf32, #tpu.memory_space<vmem>>, %arg8: memref<8x32xf32, #tpu.memory_space<vmem>>) attributes {dimension_semantics = [], scalar_prefetch = 0 : i64, scratch_operands = 0 : i64, tpu.core_type = #tpu.core_type<tc>} {
    %c0 = arith.constant 0 : index
    %c0_0 = arith.constant 0 : index
    %0 = vector.load %arg0[%c0, %c0_0] : memref<1x256xi32, #tpu.memory_space<vmem>>, vector<1x256xi32>
    %c0_1 = arith.constant 0 : index
    %c0_2 = arith.constant 0 : index
    %1 = vector.load %arg1[%c0_1, %c0_2] : memref<1x256xi32, #tpu.memory_space<vmem>>, vector<1x256xi32>
    %c0_3 = arith.constant 0 : index
    %c0_4 = arith.constant 0 : index
    %c0_5 = arith.constant 0 : index
    %2 = vector.load %arg4[%c0_3, %c0_4, %c0_5] : memref<2x256x32xf32, #tpu.memory_space<vmem>>, vector<2x256x32xf32>
    %3 = tpu.iota {dimensions = array<i32: 0>} : vector<24x256xi32>
    %cst = arith.constant 0.000000e+00 : f32
    %4 = vector.broadcast %cst : f32 to vector<24x24xf32>
    %cst_6 = arith.constant 0.000000e+00 : f32
    %5 = vector.broadcast %cst_6 : f32 to vector<24x32xf32>
    %cst_7 = arith.constant 0.000000e+00 : f32
    %6 = vector.broadcast %cst_7 : f32 to vector<24x32xf32>
    %7 = vector.broadcast %0 : vector<1x256xi32> to vector<24x256xi32>
    %8 = arith.cmpi eq, %3, %7 : vector<24x256xi32>
    %9 = arith.extui %8 : vector<24x256xi1> to vector<24x256xi32>
    %10 = arith.sitofp %9 : vector<24x256xi32> to vector<24x256xf32>
    %11 = vector.broadcast %1 : vector<1x256xi32> to vector<24x256xi32>
    %12 = arith.cmpi eq, %3, %11 : vector<24x256xi32>
    %13 = arith.extui %12 : vector<24x256xi1> to vector<24x256xi32>
    %14 = arith.sitofp %13 : vector<24x256xi32> to vector<24x256xf32>
    %cst_8 = arith.constant dense<0.000000e+00> : vector<24x24xf32>
    %15 = tpu.matmul %14, %10, %cst_8 {dimension_numbers = #tpu.dot_dimension_numbers<[1], [1], [0], [0], [0, 0, 1, 0], [], []>} : vector<24x256xf32>, vector<24x256xf32>, vector<24x24xf32> -> vector<24x24xf32>
    %16 = arith.addf %4, %15 : vector<24x24xf32>
    %17 = vector.extract_strided_slice %2 {offsets = [0, 0, 0], sizes = [1, 256, 32], strides = [1, 1, 1]} : vector<2x256x32xf32> to vector<1x256x32xf32>
    %18 = vector.shape_cast %17 : vector<1x256x32xf32> to vector<256x32xf32>
    %cst_9 = arith.constant dense<0.000000e+00> : vector<24x32xf32>
    %19 = tpu.matmul %14, %18, %cst_9 {dimension_numbers = #tpu.dot_dimension_numbers<[1], [0], [0], [1], [0, 0, 1, 1], [], []>} : vector<24x256xf32>, vector<256x32xf32>, vector<24x32xf32> -> vector<24x32xf32>
    %20 = arith.addf %5, %19 : vector<24x32xf32>
    %21 = vector.extract_strided_slice %2 {offsets = [1, 0, 0], sizes = [1, 256, 32], strides = [1, 1, 1]} : vector<2x256x32xf32> to vector<1x256x32xf32>
    %22 = vector.shape_cast %21 : vector<1x256x32xf32> to vector<256x32xf32>
    %cst_10 = arith.constant dense<0.000000e+00> : vector<24x32xf32>
    %23 = tpu.matmul %14, %22, %cst_10 {dimension_numbers = #tpu.dot_dimension_numbers<[1], [0], [0], [1], [0, 0, 1, 1], [], []>} : vector<24x256xf32>, vector<256x32xf32>, vector<24x32xf32> -> vector<24x32xf32>
    %24 = arith.addf %6, %23 : vector<24x32xf32>
    %c0_11 = arith.constant 0 : index
    %c0_12 = arith.constant 0 : index
    %25 = vector.load %arg3[%c0_11, %c0_12] : memref<24x32xf32, #tpu.memory_space<vmem>>, vector<24x32xf32>
    %c0_13 = arith.constant 0 : index
    %c0_14 = arith.constant 0 : index
    %c0_15 = arith.constant 0 : index
    %26 = vector.load %arg7[%c0_13, %c0_14, %c0_15] : memref<2x2x64xf32, #tpu.memory_space<vmem>>, vector<1x2x64xf32>
    %27 = vector.shape_cast %26 : vector<1x2x64xf32> to vector<2x64xf32>
    %cst_16 = arith.constant dense<0.000000e+00> : vector<24x32xf32>
    %28 = tpu.matmul %16, %25, %cst_16 {dimension_numbers = #tpu.dot_dimension_numbers<[1], [0], [0], [1], [0, 0, 1, 1], [], []>} : vector<24x24xf32>, vector<24x32xf32>, vector<24x32xf32> -> vector<24x32xf32>
    %29 = arith.addf %28, %20 : vector<24x32xf32>
    %c0_17 = arith.constant 0 : index
    %c0_18 = arith.constant 0 : index
    %c0_19 = arith.constant 0 : index
    %30 = vector.load %arg5[%c0_17, %c0_18, %c0_19] : memref<2x32x64xf32, #tpu.memory_space<vmem>>, vector<1x32x64xf32>
    %31 = vector.shape_cast %30 : vector<1x32x64xf32> to vector<32x64xf32>
    %cst_20 = arith.constant dense<0.000000e+00> : vector<24x64xf32>
    %32 = tpu.matmul %29, %31, %cst_20 {dimension_numbers = #tpu.dot_dimension_numbers<[1], [0], [0], [1], [0, 0, 1, 1], [], []>} : vector<24x32xf32>, vector<32x64xf32>, vector<24x64xf32> -> vector<24x64xf32>
    %33 = vector.extract_strided_slice %27 {offsets = [0, 0], sizes = [1, 64], strides = [1, 1]} : vector<2x64xf32> to vector<1x64xf32>
    %34 = vector.broadcast %33 : vector<1x64xf32> to vector<24x64xf32>
    %35 = arith.addf %32, %34 : vector<24x64xf32>
    %cst_21 = arith.constant 0.000000e+00 : f32
    %36 = vector.broadcast %cst_21 : f32 to vector<24x64xf32>
    %37 = arith.maximumf %35, %36 : vector<24x64xf32>
    %c0_22 = arith.constant 0 : index
    %c0_23 = arith.constant 0 : index
    %c0_24 = arith.constant 0 : index
    %38 = vector.load %arg6[%c0_22, %c0_23, %c0_24] : memref<2x64x32xf32, #tpu.memory_space<vmem>>, vector<1x64x32xf32>
    %39 = vector.shape_cast %38 : vector<1x64x32xf32> to vector<64x32xf32>
    %cst_25 = arith.constant dense<0.000000e+00> : vector<24x32xf32>
    %40 = tpu.matmul %37, %39, %cst_25 {dimension_numbers = #tpu.dot_dimension_numbers<[1], [0], [0], [1], [0, 0, 1, 1], [], []>} : vector<24x64xf32>, vector<64x32xf32>, vector<24x32xf32> -> vector<24x32xf32>
    %41 = vector.extract_strided_slice %27 {offsets = [1, 0], sizes = [1, 32], strides = [1, 1]} : vector<2x64xf32> to vector<1x32xf32>
    %42 = vector.broadcast %41 : vector<1x32xf32> to vector<24x32xf32>
    %43 = arith.addf %40, %42 : vector<24x32xf32>
    %cst_26 = arith.constant 0.000000e+00 : f32
    %44 = vector.broadcast %cst_26 : f32 to vector<24x32xf32>
    %45 = arith.maximumf %43, %44 : vector<24x32xf32>
    %c1 = arith.constant 1 : index
    %c0_27 = arith.constant 0 : index
    %c0_28 = arith.constant 0 : index
    %46 = vector.load %arg7[%c1, %c0_27, %c0_28] : memref<2x2x64xf32, #tpu.memory_space<vmem>>, vector<1x2x64xf32>
    %47 = vector.shape_cast %46 : vector<1x2x64xf32> to vector<2x64xf32>
    %cst_29 = arith.constant dense<0.000000e+00> : vector<24x32xf32>
    %48 = tpu.matmul %16, %45, %cst_29 {dimension_numbers = #tpu.dot_dimension_numbers<[1], [0], [0], [1], [0, 0, 1, 1], [], []>} : vector<24x24xf32>, vector<24x32xf32>, vector<24x32xf32> -> vector<24x32xf32>
    %49 = arith.addf %48, %24 : vector<24x32xf32>
    %c1_30 = arith.constant 1 : index
    %c0_31 = arith.constant 0 : index
    %c0_32 = arith.constant 0 : index
    %50 = vector.load %arg5[%c1_30, %c0_31, %c0_32] : memref<2x32x64xf32, #tpu.memory_space<vmem>>, vector<1x32x64xf32>
    %51 = vector.shape_cast %50 : vector<1x32x64xf32> to vector<32x64xf32>
    %cst_33 = arith.constant dense<0.000000e+00> : vector<24x64xf32>
    %52 = tpu.matmul %49, %51, %cst_33 {dimension_numbers = #tpu.dot_dimension_numbers<[1], [0], [0], [1], [0, 0, 1, 1], [], []>} : vector<24x32xf32>, vector<32x64xf32>, vector<24x64xf32> -> vector<24x64xf32>
    %53 = vector.extract_strided_slice %47 {offsets = [0, 0], sizes = [1, 64], strides = [1, 1]} : vector<2x64xf32> to vector<1x64xf32>
    %54 = vector.broadcast %53 : vector<1x64xf32> to vector<24x64xf32>
    %55 = arith.addf %52, %54 : vector<24x64xf32>
    %cst_34 = arith.constant 0.000000e+00 : f32
    %56 = vector.broadcast %cst_34 : f32 to vector<24x64xf32>
    %57 = arith.maximumf %55, %56 : vector<24x64xf32>
    %c1_35 = arith.constant 1 : index
    %c0_36 = arith.constant 0 : index
    %c0_37 = arith.constant 0 : index
    %58 = vector.load %arg6[%c1_35, %c0_36, %c0_37] : memref<2x64x32xf32, #tpu.memory_space<vmem>>, vector<1x64x32xf32>
    %59 = vector.shape_cast %58 : vector<1x64x32xf32> to vector<64x32xf32>
    %cst_38 = arith.constant dense<0.000000e+00> : vector<24x32xf32>
    %60 = tpu.matmul %57, %59, %cst_38 {dimension_numbers = #tpu.dot_dimension_numbers<[1], [0], [0], [1], [0, 0, 1, 1], [], []>} : vector<24x64xf32>, vector<64x32xf32>, vector<24x32xf32> -> vector<24x32xf32>
    %61 = vector.extract_strided_slice %47 {offsets = [1, 0], sizes = [1, 32], strides = [1, 1]} : vector<2x64xf32> to vector<1x32xf32>
    %62 = vector.broadcast %61 : vector<1x32xf32> to vector<24x32xf32>
    %63 = arith.addf %60, %62 : vector<24x32xf32>
    %64 = tpu.iota {dimensions = array<i32: 0>} : vector<8x24xi32>
    %c0_39 = arith.constant 0 : index
    %c0_40 = arith.constant 0 : index
    %65 = vector.load %arg2[%c0_39, %c0_40] : memref<1x24xi32, #tpu.memory_space<vmem>>, vector<1x24xi32>
    %66 = vector.broadcast %65 : vector<1x24xi32> to vector<8x24xi32>
    %67 = arith.cmpi eq, %64, %66 : vector<8x24xi32>
    %68 = arith.extui %67 : vector<8x24xi1> to vector<8x24xi32>
    %69 = arith.sitofp %68 : vector<8x24xi32> to vector<8x24xf32>
    %cst_41 = arith.constant dense<0.000000e+00> : vector<8xf32>
    %70 = vector.multi_reduction <add>, %69, %cst_41 [1] : vector<8x24xf32> to vector<8xf32>
    %71 = vector.shape_cast %70 : vector<8xf32> to vector<8x1xf32>
    %cst_42 = arith.constant 1.000000e+00 : f32
    %72 = vector.broadcast %cst_42 : f32 to vector<8x1xf32>
    %73 = arith.maximumf %71, %72 : vector<8x1xf32>
    %cst_43 = arith.constant dense<0.000000e+00> : vector<8x32xf32>
    %74 = tpu.matmul %69, %63, %cst_43 {dimension_numbers = #tpu.dot_dimension_numbers<[1], [0], [0], [1], [0, 0, 1, 1], [], []>} : vector<8x24xf32>, vector<24x32xf32>, vector<8x32xf32> -> vector<8x32xf32>
    %75 = vector.broadcast %73 : vector<8x1xf32> to vector<8x32xf32>
    %76 = arith.divf %74, %75 : vector<8x32xf32>
    %c0_44 = arith.constant 0 : index
    %c0_45 = arith.constant 0 : index
    %77 = vector.load %arg8[%c0_44, %c0_45] : memref<8x32xf32, #tpu.memory_space<vmem>>, vector<8x32xf32>
    tpu.vector_store %arg8[%c0_44, %c0_45], %76 {strides = array<i32>} : memref<8x32xf32, #tpu.memory_space<vmem>>, vector<8x32xf32>,
    return
  }
}

</mosaic_0001>

<llo_original>
// kernel: tpu_custom_call.1
$region0: #{tpu_custom_call.1}
  #allocation0 [shape = 'u32[]', space=smem, size = 0x4, offset = 0x4, fixed_abs, tag = 'smem constant byte address 0x4 - core index']
  #allocation1 [shape = 'u32[144,128]{1,0:T(1,128)}', space=vmem, size = 0x12000, scoped, tag = 'internal scratch']
  %s0 = inlined_call_operand.vmem [shape: s32[1,256], index: 0, kind: input, shape index: {}]
  %s1 = inlined_call_operand.vmem [shape: s32[1,256], index: 1, kind: input, shape index: {}]
  %s2 = inlined_call_operand.vmem [shape: s32[1,24], index: 2, kind: input, shape index: {}]
  %s3 = inlined_call_operand.vmem [shape: f32[24,32], index: 3, kind: input, shape index: {}]
  %s4 = inlined_call_operand.vmem [shape: f32[2,256,32], index: 4, kind: input, shape index: {}]
  %s5 = inlined_call_operand.vmem [shape: f32[2,32,64], index: 5, kind: input, shape index: {}]
  %s6 = inlined_call_operand.vmem [shape: f32[2,64,32], index: 6, kind: input, shape index: {}]
  %s7 = inlined_call_operand.vmem [shape: f32[2,2,64], index: 7, kind: input, shape index: {}]
  %s8 = inlined_call_operand.hbm [shape: f32[8,32], index: 8, kind: output, shape index: {}]
  %s9 = sld [smem:[#allocation0]]
  $region42: #{tpu_custom_call.1} parent=0
    _
  %s11 = ssub.s32 1, %s9
  %s12 = scalar_select 0, %s11, %s9
  $region1: #{tpu_custom_call.1} parent=0
    #allocation2 [shape = 'u8[4096]{0}', space=vmem, size = 0x1000, scoped, tag = 'output window, operand 0, single buffered']
    #allocation3 [shape = 's32[1]{0}', space=sflag, size = 0x4, scoped, tag = 'scoped memory for tpu_custom_call.1']
    %13 = vsyncpa [#allocation3], 0
    // Predicated region
    $region2: #{tpu_custom_call.1} parent=1 // pred_check
      _
    $region3: #{tpu_custom_call.1} parent=1 // pred_check_branch
      %15 = sbr.rel (0) target = $region5
    $region4: #{tpu_custom_call.1} parent=1 // pred_region
      _
    $region5: #{tpu_custom_call.1} parent=1 // pred_fallthru
      _
    // Predicated region
    $region6: #{tpu_custom_call.1} parent=1 // pred_check
      _
    $region7: #{tpu_custom_call.1} parent=1 // pred_check_branch
      %17 = sbr.rel (0) target = $region9
    $region8: #{tpu_custom_call.1} parent=1 // pred_region
      _
    $region9: #{tpu_custom_call.1} parent=1 // pred_fallthru
      _
    // Predicated region
    $region10: #{tpu_custom_call.1} parent=1 // pred_check
      _
    $region11: #{tpu_custom_call.1} parent=1 // pred_check_branch
      %19 = sbr.rel (0) target = $region13
    $region12: #{tpu_custom_call.1} parent=1 // pred_region
      _
    $region13: #{tpu_custom_call.1} parent=1 // pred_fallthru
      _
    // Predicated region
    $region14: #{tpu_custom_call.1} parent=1 // pred_check
      _
    $region15: #{tpu_custom_call.1} parent=1 // pred_check_branch
      %21 = sbr.rel (0) target = $region17
    $region16: #{tpu_custom_call.1} parent=1 // pred_region
      _
    $region17: #{tpu_custom_call.1} parent=1 // pred_fallthru
      _
    // Predicated region
    $region18: #{tpu_custom_call.1} parent=1 // pred_check
      _
    $region19: #{tpu_custom_call.1} parent=1 // pred_check_branch
      %23 = sbr.rel (0) target = $region21
    $region20: #{tpu_custom_call.1} parent=1 // pred_region
      _
    $region21: #{tpu_custom_call.1} parent=1 // pred_fallthru
      _
    // Predicated region
    $region22: #{tpu_custom_call.1} parent=1 // pred_check
      _
    $region23: #{tpu_custom_call.1} parent=1 // pred_check_branch
      %25 = sbr.rel (0) target = $region25
    $region24: #{tpu_custom_call.1} parent=1 // pred_region
      _
    $region25: #{tpu_custom_call.1} parent=1 // pred_fallthru
      _
    // Predicated region
    $region26: #{tpu_custom_call.1} parent=1 // pred_check
      _
    $region27: #{tpu_custom_call.1} parent=1 // pred_check_branch
      %27 = sbr.rel (0) target = $region29
    $region28: #{tpu_custom_call.1} parent=1 // pred_region
      _
    $region29: #{tpu_custom_call.1} parent=1 // pred_fallthru
      _
    // Predicated region
    $region30: #{tpu_custom_call.1} parent=1 // pred_check
      _
    $region31: #{tpu_custom_call.1} parent=1 // pred_check_branch
      %29 = sbr.rel (0) target = $region33
    $region32: #{tpu_custom_call.1} parent=1 // pred_region
      _
    $region33: #{tpu_custom_call.1} parent=1 // pred_fallthru
      _
    %v30 = vld [vmem:[%s0] sm:$0x3]
    %v31 = vld [vmem:[%s1] sm:$0x3]
    %v32 = vld [vmem:[%s4] sm:$0xff]
    %v33 = vld [vmem:[%s4 + $0x8] sm:$0xff]
    %v34 = vld [vmem:[%s4 + $0x10] sm:$0xff]
    %v35 = vld [vmem:[%s4 + $0x18] sm:$0xff]
    %v36 = vld [vmem:[%s4 + $0x20] sm:$0xff]
    %v37 = vld [vmem:[%s4 + $0x28] sm:$0xff]
    %v38 = vld [vmem:[%s4 + $0x30] sm:$0xff]
    %v39 = vld [vmem:[%s4 + $0x38] sm:$0xff]
    %v40 = vld [vmem:[%s4 + $0x40] sm:$0xff]
    %v41 = vld [vmem:[%s4 + $0x48] sm:$0xff]
    %v42 = vld [vmem:[%s4 + $0x50] sm:$0xff]
    %v43 = vld [vmem:[%s4 + $0x58] sm:$0xff]
    %v44 = vld [vmem:[%s4 + $0x60] sm:$0xff]
    %v45 = vld [vmem:[%s4 + $0x68] sm:$0xff]
    %v46 = vld [vmem:[%s4 + $0x70] sm:$0xff]
    %v47 = vld [vmem:[%s4 + $0x78] sm:$0xff]
    %v48 = vld [vmem:[%s4 + $0x80] sm:$0xff]
    %v49 = vld [vmem:[%s4 + $0x88] sm:$0xff]
    %v50 = vld [vmem:[%s4 + $0x90] sm:$0xff]
    %v51 = vld [vmem:[%s4 + $0x98] sm:$0xff]
    %v52 = vld [vmem:[%s4 + $0xa0] sm:$0xff]
    %v53 = vld [vmem:[%s4 + $0xa8] sm:$0xff]
    %v54 = vld [vmem:[%s4 + $0xb0] sm:$0xff]
    %v55 = vld [vmem:[%s4 + $0xb8] sm:$0xff]
    %v56 = vld [vmem:[%s4 + $0xc0] sm:$0xff]
    %v57 = vld [vmem:[%s4 + $0xc8] sm:$0xff]
    %v58 = vld [vmem:[%s4 + $0xd0] sm:$0xff]
    %v59 = vld [vmem:[%s4 + $0xd8] sm:$0xff]
    %v60 = vld [vmem:[%s4 + $0xe0] sm:$0xff]
    %v61 = vld [vmem:[%s4 + $0xe8] sm:$0xff]
    %v62 = vld [vmem:[%s4 + $0xf0] sm:$0xff]
    %v63 = vld [vmem:[%s4 + $0xf8] sm:$0xff]
    %v64 = vld [vmem:[%s4 + $0x100] sm:$0xff]
    %v65 = vld [vmem:[%s4 + $0x108] sm:$0xff]
    %v66 = vld [vmem:[%s4 + $0x110] sm:$0xff]
    %v67 = vld [vmem:[%s4 + $0x118] sm:$0xff]
    %v68 = vld [vmem:[%s4 + $0x120] sm:$0xff]
    %v69 = vld [vmem:[%s4 + $0x128] sm:$0xff]
    %v70 = vld [vmem:[%s4 + $0x130] sm:$0xff]
    %v71 = vld [vmem:[%s4 + $0x138] sm:$0xff]
    %v72 = vld [vmem:[%s4 + $0x140] sm:$0xff]
    %v73 = vld [vmem:[%s4 + $0x148] sm:$0xff]
    %v74 = vld [vmem:[%s4 + $0x150] sm:$0xff]
    %v75 = vld [vmem:[%s4 + $0x158] sm:$0xff]
    %v76 = vld [vmem:[%s4 + $0x160] sm:$0xff]
    %v77 = vld [vmem:[%s4 + $0x168] sm:$0xff]
    %v78 = vld [vmem:[%s4 + $0x170] sm:$0xff]
    %v79 = vld [vmem:[%s4 + $0x178] sm:$0xff]
    %v80 = vld [vmem:[%s4 + $0x180] sm:$0xff]
    %v81 = vld [vmem:[%s4 + $0x188] sm:$0xff]
    %v82 = vld [vmem:[%s4 + $0x190] sm:$0xff]
    %v83 = vld [vmem:[%s4 + $0x198] sm:$0xff]
    %v84 = vld [vmem:[%s4 + $0x1a0] sm:$0xff]
    %v85 = vld [vmem:[%s4 + $0x1a8] sm:$0xff]
    %v86 = vld [vmem:[%s4 + $0x1b0] sm:$0xff]
    %v87 = vld [vmem:[%s4 + $0x1b8] sm:$0xff]
    %v88 = vld [vmem:[%s4 + $0x1c0] sm:$0xff]
    %v89 = vld [vmem:[%s4 + $0x1c8] sm:$0xff]
    %v90 = vld [vmem:[%s4 + $0x1d0] sm:$0xff]
    %v91 = vld [vmem:[%s4 + $0x1d8] sm:$0xff]
    %v92 = vld [vmem:[%s4 + $0x1e0] sm:$0xff]
    %v93 = vld [vmem:[%s4 + $0x1e8] sm:$0xff]
    %v94 = vld [vmem:[%s4 + $0x1f0] sm:$0xff]
    %v95 = vld [vmem:[%s4 + $0x1f8] sm:$0xff]
    %v96 = vlaneseq
    %v97 = vshrl.u32 %v96, 7
    %v98 = vadd.s32 %v97, 8
    %v99 = vadd.s32 %v97, 16
    %v100 = vlaneseq
    %v101 = vshrl.u32 %v100, 7
    %v102 = vsub.s32 0, %v101
    %v103 = vrot.slane %v30, %v102
    %v104 = vlaneseq
    %v105 = vshrl.u32 %v104, 7
    %v106 = vsub.s32 1, %v105
    %v107 = vrot.slane %v30, %v106
    %vm108 = vcmp.eq.s32.totalorder %v97, %v103
    %vm109 = vcmp.eq.s32.totalorder %v97, %v107
    %vm110 = vcmp.eq.s32.totalorder %v98, %v103
    %vm111 = vcmp.eq.s32.totalorder %v98, %v107
    %vm112 = vcmp.eq.s32.totalorder %v99, %v103
    %vm113 = vcmp.eq.s32.totalorder %v99, %v107
    %v114 = vsel %vm108, 1, 0
    %v115 = vsel %vm109, 1, 0
    %v116 = vsel %vm110, 1, 0
    %v117 = vsel %vm111, 1, 0
    %v118 = vsel %vm112, 1, 0
    %v119 = vsel %vm113, 1, 0
    %v120 = vcvt.s32.f32 %v114
    %v121 = vcvt.s32.f32 %v115
    %v122 = vcvt.s32.f32 %v116
    %v123 = vcvt.s32.f32 %v117
    %v124 = vcvt.s32.f32 %v118
    %v125 = vcvt.s32.f32 %v119
    %v126 = vlaneseq
    %v127 = vshrl.u32 %v126, 7
    %v128 = vsub.s32 0, %v127
    %v129 = vrot.slane %v31, %v128
    %v130 = vlaneseq
    %v131 = vshrl.u32 %v130, 7
    %v132 = vsub.s32 1, %v131
    %v133 = vrot.slane %v31, %v132
    %vm134 = vcmp.eq.s32.totalorder %v97, %v129
    %vm135 = vcmp.eq.s32.totalorder %v97, %v133
    %vm136 = vcmp.eq.s32.totalorder %v98, %v129
    %vm137 = vcmp.eq.s32.totalorder %v98, %v133
    %vm138 = vcmp.eq.s32.totalorder %v99, %v129
    %vm139 = vcmp.eq.s32.totalorder %v99, %v133
    %v140 = vsel %vm134, 1, 0
    %v141 = vsel %vm135, 1, 0
    %v142 = vsel %vm136, 1, 0
    %v143 = vsel %vm137, 1, 0
    %v144 = vsel %vm138, 1, 0
    %v145 = vsel %vm139, 1, 0
    %v146 = vcvt.s32.f32 %v140
    %v147 = vcvt.s32.f32 %v141
    %v148 = vcvt.s32.f32 %v142
    %v149 = vcvt.s32.f32 %v143
    %v150 = vcvt.s32.f32 %v144
    %v151 = vcvt.s32.f32 %v145
    %152 = vmatprep.subr.mxu0 0.0
    %153 = vmatpush1.xpose.msra.mxu0 0.0
    %154 = vmatprep.subr.mxu0 0.0
    %155 = vmatpush1.xpose.msra.mxu0 0.0
    %156 = vmatprep.subr.mxu0 0.0
    %157 = vmatpush1.xpose.msra.mxu0 0.0
    %158 = vmatprep.subr.mxu0 0.0
    %159 = vmatpush1.xpose.msra.mxu0 0.0
    %160 = vmatprep.subr.mxu0 0.0
    %161 = vmatpush1.xpose.msra.mxu0 0.0
    %162 = vmatprep.subr.mxu0 0.0
    %163 = vmatpush1.xpose.msra.mxu0 0.0
    %164 = vmatprep.subr.mxu0 0.0
    %165 = vmatpush1.xpose.msra.mxu0 0.0
    %166 = vmatprep.subr.mxu0 0.0
    %167 = vmatpush1.xpose.msra.mxu0 0.0
    %168 = vmatprep.subr.mxu0 0.0
    %169 = vmatpush1.xpose.msra.mxu0 0.0
    %170 = vmatprep.subr.mxu0 0.0
    %171 = vmatpush1.xpose.msra.mxu0 0.0
    %172 = vmatprep.subr.mxu0 0.0
    %173 = vmatpush1.xpose.msra.mxu0 0.0
    %174 = vmatprep.subr.mxu0 0.0
    %175 = vmatpush1.xpose.msra.mxu0 0.0
    %176 = vmatprep.subr.mxu0 0.0
    %177 = vmatpush1.xpose.msra.mxu0 0.0
    %178 = vmatprep.subr.mxu0 %v125
    %179 = vmatpush1.xpose.msra.mxu0 %v124
    %180 = vmatprep.subr.mxu0 %v123
    %181 = vmatpush1.xpose.msra.mxu0 %v122
    %182 = vmatprep.subr.mxu0 %v121
    %183 = vmatpush1.xpose.msra.mxu0 %v120
    %184 = vmatprep.subr.mxu0 0.0
    %185 = vmatpush2.xpose.msra.mxu0 0.0
    %186 = vmatprep.subr.mxu0 0.0
    %187 = vmatpush2.xpose.msra.mxu0 0.0
    %188 = vmatprep.subr.mxu0 0.0
    %189 = vmatpush2.xpose.msra.mxu0 0.0
    %190 = vmatprep.subr.mxu0 0.0
    %191 = vmatpush2.xpose.msra.mxu0 0.0
    %192 = vmatprep.subr.mxu0 0.0
    %193 = vmatpush2.xpose.msra.mxu0 0.0
    %194 = vmatprep.subr.mxu0 0.0
    %195 = vmatpush2.xpose.msra.mxu0 0.0
    %196 = vmatprep.subr.mxu0 0.0
    %197 = vmatpush2.xpose.msra.mxu0 0.0
    %198 = vmatprep.subr.mxu0 0.0
    %199 = vmatpush2.xpose.msra.mxu0 0.0
    %200 = vmatprep.subr.mxu0 0.0
    %201 = vmatpush2.xpose.msra.mxu0 0.0
    %202 = vmatprep.subr.mxu0 0.0
    %203 = vmatpush2.xpose.msra.mxu0 0.0
    %204 = vmatprep.subr.mxu0 0.0
    %205 = vmatpush2.xpose.msra.mxu0 0.0
    %206 = vmatprep.subr.mxu0 0.0
    %207 = vmatpush2.xpose.msra.mxu0 0.0
    %208 = vmatprep.subr.mxu0 0.0
    %209 = vmatpush2.xpose.msra.mxu0 0.0
    %210 = vmatprep.subr.mxu0 0.0
    %211 = vmatpush2.xpose.msra.mxu0 0.0
    %212 = vmatprep.subr.mxu0 0.0
    %213 = vmatpush2.xpose.msra.mxu0 0.0
    %214 = vmatprep.subr.mxu0 0.0
    %215 = vmatpush2.xpose.msra.mxu0 0.0
    %216 = vmatprep.mubr.f32.mxu0 %v147
    %217 = vmatmul.mubr.f32.gmra.mxu0 %v146
    %v218 = vpop.f32.mrf.mxu0
    %v219 = vadd.f32 0.0, %v218
    %v220 = vpop.f32.mrf.mxu0
    %221 = vmatprep.mubr.f32.mxu0 %v149
    %222 = vmatmul.mubr.f32.gmra.mxu0 %v148
    %v223 = vpop.f32.mrf.mxu0
    %v224 = vadd.f32 0.0, %v223
    %v225 = vpop.f32.mrf.mxu0
    %226 = vmatprep.mubr.f32.mxu0 %v151
    %227 = vmatmul.mubr.f32.gmra.mxu0 %v150
    %v228 = vpop.f32.mrf.mxu0
    %v229 = vadd.f32 0.0, %v228
    %v230 = vpop.f32.mrf.mxu0
    %231 = vdwg.mxu0
    %232 = vmatprep.subr.mxu0 0.0
    %233 = vmatpush1.msra.mxu0 %v47
    %234 = vmatprep.subr.mxu0 0.0
    %235 = vmatpush1.msra.mxu0 %v46
    %236 = vmatprep.subr.mxu0 0.0
    %237 = vmatpush1.msra.mxu0 %v45
    %238 = vmatprep.subr.mxu0 0.0
    %239 = vmatpush1.msra.mxu0 %v44
    %240 = vmatprep.subr.mxu0 0.0
    %241 = vmatpush1.msra.mxu0 %v43
    %242 = vmatprep.subr.mxu0 0.0
    %243 = vmatpush1.msra.mxu0 %v42
    %244 = vmatprep.subr.mxu0 0.0
    %245 = vmatpush1.msra.mxu0 %v41
    %246 = vmatprep.subr.mxu0 0.0
    %247 = vmatpush1.msra.mxu0 %v40
    %248 = vmatprep.subr.mxu0 0.0
    %249 = vmatpush1.msra.mxu0 %v39
    %250 = vmatprep.subr.mxu0 0.0
    %251 = vmatpush1.msra.mxu0 %v38
    %252 = vmatprep.subr.mxu0 0.0
    %253 = vmatpush1.msra.mxu0 %v37
    %254 = vmatprep.subr.mxu0 0.0
    %255 = vmatpush1.msra.mxu0 %v36
    %256 = vmatprep.subr.mxu0 0.0
    %257 = vmatpush1.msra.mxu0 %v35
    %258 = vmatprep.subr.mxu0 0.0
    %259 = vmatpush1.msra.mxu0 %v34
    %260 = vmatprep.subr.mxu0 0.0
    %261 = vmatpush1.msra.mxu0 %v33
    %262 = vmatprep.subr.mxu0 0.0
    %263 = vmatpush1.msra.mxu0 %v32
    %264 = vmatprep.subr.mxu0 0.0
    %265 = vmatpush2.msra.mxu0 %v63
    %266 = vmatprep.subr.mxu0 0.0
    %267 = vmatpush2.msra.mxu0 %v62
    %268 = vmatprep.subr.mxu0 0.0
    %269 = vmatpush2.msra.mxu0 %v61
    %270 = vmatprep.subr.mxu0 0.0
    %271 = vmatpush2.msra.mxu0 %v60
    %272 = vmatprep.subr.mxu0 0.0
    %273 = vmatpush2.msra.mxu0 %v59
    %274 = vmatprep.subr.mxu0 0.0
    %275 = vmatpush2.msra.mxu0 %v58
    %276 = vmatprep.subr.mxu0 0.0
    %277 = vmatpush2.msra.mxu0 %v57
    %278 = vmatprep.subr.mxu0 0.0
    %279 = vmatpush2.msra.mxu0 %v56
    %280 = vmatprep.subr.mxu0 0.0
    %281 = vmatpush2.msra.mxu0 %v55
    %282 = vmatprep.subr.mxu0 0.0
    %283 = vmatpush2.msra.mxu0 %v54
    %284 = vmatprep.subr.mxu0 0.0
    %285 = vmatpush2.msra.mxu0 %v53
    %286 = vmatprep.subr.mxu0 0.0
    %287 = vmatpush2.msra.mxu0 %v52
    %288 = vmatprep.subr.mxu0 0.0
    %289 = vmatpush2.msra.mxu0 %v51
    %290 = vmatprep.subr.mxu0 0.0
    %291 = vmatpush2.msra.mxu0 %v50
    %292 = vmatprep.subr.mxu0 0.0
    %293 = vmatpush2.msra.mxu0 %v49
    %294 = vmatprep.subr.mxu0 0.0
    %295 = vmatpush2.msra.mxu0 %v48
    %296 = vmatprep.mubr.f32.mxu0 %v147
    %297 = vmatmul.mubr.f32.gmra.mxu0 %v146
    %v298 = vpop.f32.mrf.mxu0
    %v299 = vadd.f32 0.0, %v298
    %v300 = vpop.f32.mrf.mxu0
    %301 = vmatprep.mubr.f32.mxu0 %v149
    %302 = vmatmul.mubr.f32.gmra.mxu0 %v148
    %v303 = vpop.f32.mrf.mxu0
    %v304 = vadd.f32 0.0, %v303
    %v305 = vpop.f32.mrf.mxu0
    %306 = vmatprep.mubr.f32.mxu0 %v151
    %307 = vmatmul.mubr.f32.gmra.mxu0 %v150
    %v308 = vpop.f32.mrf.mxu0
    %v309 = vadd.f32 0.0, %v308
    %v310 = vpop.f32.mrf.mxu0
    %311 = vdwg.mxu0
    %312 = vmatprep.subr.mxu0 0.0
    %313 = vmatpush1.msra.mxu0 %v79
    %314 = vmatprep.subr.mxu0 0.0
    %315 = vmatpush1.msra.mxu0 %v78
    %316 = vmatprep.subr.mxu0 0.0
    %317 = vmatpush1.msra.mxu0 %v77
    %318 = vmatprep.subr.mxu0 0.0
    %319 = vmatpush1.msra.mxu0 %v76
    %320 = vmatprep.subr.mxu0 0.0
    %321 = vmatpush1.msra.mxu0 %v75
    %322 = vmatprep.subr.mxu0 0.0
    %323 = vmatpush1.msra.mxu0 %v74
    %324 = vmatprep.subr.mxu0 0.0
    %325 = vmatpush1.msra.mxu0 %v73
    %326 = vmatprep.subr.mxu0 0.0
    %327 = vmatpush1.msra.mxu0 %v72
    %328 = vmatprep.subr.mxu0 0.0
    %329 = vmatpush1.msra.mxu0 %v71
    %330 = vmatprep.subr.mxu0 0.0
    %331 = vmatpush1.msra.mxu0 %v70
    %332 = vmatprep.subr.mxu0 0.0
    %333 = vmatpush1.msra.mxu0 %v69
    %334 = vmatprep.subr.mxu0 0.0
    %335 = vmatpush1.msra.mxu0 %v68
    %336 = vmatprep.subr.mxu0 0.0
    %337 = vmatpush1.msra.mxu0 %v67
    %338 = vmatprep.subr.mxu0 0.0
    %339 = vmatpush1.msra.mxu0 %v66
    %340 = vmatprep.subr.mxu0 0.0
    %341 = vmatpush1.msra.mxu0 %v65
    %342 = vmatprep.subr.mxu0 0.0
    %343 = vmatpush1.msra.mxu0 %v64
    %344 = vmatprep.subr.mxu0 0.0
    %345 = vmatpush2.msra.mxu0 %v95
    %346 = vmatprep.subr.mxu0 0.0
    %347 = vmatpush2.msra.mxu0 %v94
    %348 = vmatprep.subr.mxu0 0.0
    %349 = vmatpush2.msra.mxu0 %v93
    %350 = vmatprep.subr.mxu0 0.0
    %351 = vmatpush2.msra.mxu0 %v92
    %352 = vmatprep.subr.mxu0 0.0
    %353 = vmatpush2.msra.mxu0 %v91
    %354 = vmatprep.subr.mxu0 0.0
    %355 = vmatpush2.msra.mxu0 %v90
    %356 = vmatprep.subr.mxu0 0.0
    %357 = vmatpush2.msra.mxu0 %v89
    %358 = vmatprep.subr.mxu0 0.0
    %359 = vmatpush2.msra.mxu0 %v88
    %360 = vmatprep.subr.mxu0 0.0
    %361 = vmatpush2.msra.mxu0 %v87
    %362 = vmatprep.subr.mxu0 0.0
    %363 = vmatpush2.msra.mxu0 %v86
    %364 = vmatprep.subr.mxu0 0.0
    %365 = vmatpush2.msra.mxu0 %v85
    %366 = vmatprep.subr.mxu0 0.0
    %367 = vmatpush2.msra.mxu0 %v84
    %368 = vmatprep.subr.mxu0 0.0
    %369 = vmatpush2.msra.mxu0 %v83
    %370 = vmatprep.subr.mxu0 0.0
    %371 = vmatpush2.msra.mxu0 %v82
    %372 = vmatprep.subr.mxu0 0.0
    %373 = vmatpush2.msra.mxu0 %v81
    %374 = vmatprep.subr.mxu0 0.0
    %375 = vmatpush2.msra.mxu0 %v80
    %376 = vmatprep.mubr.f32.mxu0 %v147
    %377 = vmatmul.mubr.f32.gmra.mxu0 %v146
    %v378 = vpop.f32.mrf.mxu0
    %v379 = vadd.f32 0.0, %v378
    %v380 = vpop.f32.mrf.mxu0
    %381 = vmatprep.mubr.f32.mxu0 %v149
    %382 = vmatmul.mubr.f32.gmra.mxu0 %v148
    %v383 = vpop.f32.mrf.mxu0
    %v384 = vadd.f32 0.0, %v383
    %v385 = vpop.f32.mrf.mxu0
    %386 = vmatprep.mubr.f32.mxu0 %v151
    %387 = vmatmul.mubr.f32.gmra.mxu0 %v150
    %v388 = vpop.f32.mrf.mxu0
    %v389 = vadd.f32 0.0, %v388
    %v390 = vpop.f32.mrf.mxu0
    %391 = vdwg.mxu0
    %v392 = vld [vmem:[%s3] sm:$0xff]
    %v393 = vld [vmem:[%s3 + $0x8] sm:$0xff]
    %v394 = vld [vmem:[%s3 + $0x10] sm:$0xff]
    %v395 = vld [vmem:[%s7] sm:$0x3]
    %vm396 = vcmask 195584
    %v398 = vsel %vm396, %v219, 0
    %v401 = vsel %vm396, %v224, 0
    %v404 = vsel %vm396, %v229, 0
    %406 = vmatprep.subr.mxu0 0.0
    %407 = vmatpush1.msra.mxu0 0.0
    %408 = vmatprep.subr.mxu0 0.0
    %409 = vmatpush1.msra.mxu0 0.0
    %410 = vmatprep.subr.mxu0 0.0
    %411 = vmatpush1.msra.mxu0 0.0
    %412 = vmatprep.subr.mxu0 0.0
    %413 = vmatpush1.msra.mxu0 0.0
    %414 = vmatprep.subr.mxu0 0.0
    %415 = vmatpush1.msra.mxu0 0.0
    %416 = vmatprep.subr.mxu0 0.0
    %417 = vmatpush1.msra.mxu0 0.0
    %418 = vmatprep.subr.mxu0 0.0
    %419 = vmatpush1.msra.mxu0 0.0
    %420 = vmatprep.subr.mxu0 0.0
    %421 = vmatpush1.msra.mxu0 0.0
    %422 = vmatprep.subr.mxu0 0.0
    %423 = vmatpush1.msra.mxu0 0.0
    %424 = vmatprep.subr.mxu0 0.0
    %425 = vmatpush1.msra.mxu0 0.0
    %426 = vmatprep.subr.mxu0 0.0
    %427 = vmatpush1.msra.mxu0 0.0
    %428 = vmatprep.subr.mxu0 0.0
    %429 = vmatpush1.msra.mxu0 0.0
    %430 = vmatprep.subr.mxu0 0.0
    %431 = vmatpush1.msra.mxu0 0.0
    %432 = vmatprep.subr.mxu0 0.0
    %433 = vmatpush1.msra.mxu0 %v394
    %434 = vmatprep.subr.mxu0 0.0
    %435 = vmatpush1.msra.mxu0 %v393
    %436 = vmatprep.subr.mxu0 0.0
    %437 = vmatpush1.msra.mxu0 %v392
    %438 = vmatprep.subr.mxu0 0.0
    %439 = vmatpush2.msra.mxu0 0.0
    %440 = vmatprep.subr.mxu0 0.0
    %441 = vmatpush2.msra.mxu0 0.0
    %442 = vmatprep.subr.mxu0 0.0
    %443 = vmatpush2.msra.mxu0 0.0
    %444 = vmatprep.subr.mxu0 0.0
    %445 = vmatpush2.msra.mxu0 0.0
    %446 = vmatprep.subr.mxu0 0.0
    %447 = vmatpush2.msra.mxu0 0.0
    %448 = vmatprep.subr.mxu0 0.0
    %449 = vmatpush2.msra.mxu0 0.0
    %450 = vmatprep.subr.mxu0 0.0
    %451 = vmatpush2.msra.mxu0 0.0
    %452 = vmatprep.subr.mxu0 0.0
    %453 = vmatpush2.msra.mxu0 0.0
    %454 = vmatprep.subr.mxu0 0.0
    %455 = vmatpush2.msra.mxu0 0.0
    %456 = vmatprep.subr.mxu0 0.0
    %457 = vmatpush2.msra.mxu0 0.0
    %458 = vmatprep.subr.mxu0 0.0
    %459 = vmatpush2.msra.mxu0 0.0
    %460 = vmatprep.subr.mxu0 0.0
    %461 = vmatpush2.msra.mxu0 0.0
    %462 = vmatprep.subr.mxu0 0.0
    %463 = vmatpush2.msra.mxu0 0.0
    %464 = vmatprep.subr.mxu0 0.0
    %465 = vmatpush2.msra.mxu0 0.0
    %466 = vmatprep.subr.mxu0 0.0
    %467 = vmatpush2.msra.mxu0 0.0
    %468 = vmatprep.subr.mxu0 0.0
    %469 = vmatpush2.msra.mxu0 0.0
    %470 = vmatprep.mubr.f32.mxu0 0.0
    %471 = vmatmul.mubr.f32.gmra.mxu0 %v398
    %v472 = vpop.f32.mrf.mxu0
    %v473 = vadd.f32 %v299, %v472
    %v474 = vpop.f32.mrf.mxu0
    %475 = vmatprep.mubr.f32.mxu0 0.0
    %476 = vmatmul.mubr.f32.gmra.mxu0 %v401
    %v477 = vpop.f32.mrf.mxu0
    %v478 = vadd.f32 %v304, %v477
    %v479 = vpop.f32.mrf.mxu0
    %480 = vmatprep.mubr.f32.mxu0 0.0
    %481 = vmatmul.mubr.f32.gmra.mxu0 %v404
    %v482 = vpop.f32.mrf.mxu0
    %v483 = vadd.f32 %v309, %v482
    %v484 = vpop.f32.mrf.mxu0
    %485 = vdwg.mxu0
    %v486 = vld [vmem:[%s5] sm:$0xff]
    %v487 = vld [vmem:[%s5 + $0x8] sm:$0xff]
    %v488 = vld [vmem:[%s5 + $0x10] sm:$0xff]
    %v489 = vld [vmem:[%s5 + $0x18] sm:$0xff]
    %v490 = vlaneseq
    %v491 = vshrl.u32 %v490, 7
    %v492 = vsub.s32 0, %v491
    %v493 = vrot.slane %v395, %v492
    %vm494 = vcmask 261120
    %v496 = vsel %vm494, %v473, 0
    %v499 = vsel %vm494, %v478, 0
    %v502 = vsel %vm494, %v483, 0
    %504 = vmatprep.subr.mxu0 0.0
    %505 = vmatpush1.msra.mxu0 0.0
    %506 = vmatprep.subr.mxu0 0.0
    %507 = vmatpush1.msra.mxu0 0.0
    %508 = vmatprep.subr.mxu0 0.0
    %509 = vmatpush1.msra.mxu0 0.0
    %510 = vmatprep.subr.mxu0 0.0
    %511 = vmatpush1.msra.mxu0 0.0
    %512 = vmatprep.subr.mxu0 0.0
    %513 = vmatpush1.msra.mxu0 0.0
    %514 = vmatprep.subr.mxu0 0.0
    %515 = vmatpush1.msra.mxu0 0.0
    %516 = vmatprep.subr.mxu0 0.0
    %517 = vmatpush1.msra.mxu0 0.0
    %518 = vmatprep.subr.mxu0 0.0
    %519 = vmatpush1.msra.mxu0 0.0
    %520 = vmatprep.subr.mxu0 0.0
    %521 = vmatpush1.msra.mxu0 0.0
    %522 = vmatprep.subr.mxu0 0.0
    %523 = vmatpush1.msra.mxu0 0.0
    %524 = vmatprep.subr.mxu0 0.0
    %525 = vmatpush1.msra.mxu0 0.0
    %526 = vmatprep.subr.mxu0 0.0
    %527 = vmatpush1.msra.mxu0 0.0
    %528 = vmatprep.subr.mxu0 0.0
    %529 = vmatpush1.msra.mxu0 %v489
    %530 = vmatprep.subr.mxu0 0.0
    %531 = vmatpush1.msra.mxu0 %v488
    %532 = vmatprep.subr.mxu0 0.0
    %533 = vmatpush1.msra.mxu0 %v487
    %534 = vmatprep.subr.mxu0 0.0
    %535 = vmatpush1.msra.mxu0 %v486
    %536 = vmatprep.subr.mxu0 0.0
    %537 = vmatpush2.msra.mxu0 0.0
    %538 = vmatprep.subr.mxu0 0.0
    %539 = vmatpush2.msra.mxu0 0.0
    %540 = vmatprep.subr.mxu0 0.0
    %541 = vmatpush2.msra.mxu0 0.0
    %542 = vmatprep.subr.mxu0 0.0
    %543 = vmatpush2.msra.mxu0 0.0
    %544 = vmatprep.subr.mxu0 0.0
    %545 = vmatpush2.msra.mxu0 0.0
    %546 = vmatprep.subr.mxu0 0.0
    %547 = vmatpush2.msra.mxu0 0.0
    %548 = vmatprep.subr.mxu0 0.0
    %549 = vmatpush2.msra.mxu0 0.0
    %550 = vmatprep.subr.mxu0 0.0
    %551 = vmatpush2.msra.mxu0 0.0
    %552 = vmatprep.subr.mxu0 0.0
    %553 = vmatpush2.msra.mxu0 0.0
    %554 = vmatprep.subr.mxu0 0.0
    %555 = vmatpush2.msra.mxu0 0.0
    %556 = vmatprep.subr.mxu0 0.0
    %557 = vmatpush2.msra.mxu0 0.0
    %558 = vmatprep.subr.mxu0 0.0
    %559 = vmatpush2.msra.mxu0 0.0
    %560 = vmatprep.subr.mxu0 0.0
    %561 = vmatpush2.msra.mxu0 0.0
    %562 = vmatprep.subr.mxu0 0.0
    %563 = vmatpush2.msra.mxu0 0.0
    %564 = vmatprep.subr.mxu0 0.0
    %565 = vmatpush2.msra.mxu0 0.0
    %566 = vmatprep.subr.mxu0 0.0
    %567 = vmatpush2.msra.mxu0 0.0
    %568 = vmatprep.mubr.f32.mxu0 0.0
    %569 = vmatmul.mubr.f32.gmra.mxu0 %v496
    %v570 = vpop.f32.mrf.mxu0
    %v571 = vadd.f32 %v493, %v570
    %v572 = vpop.f32.mrf.mxu0
    %573 = vmatprep.mubr.f32.mxu0 0.0
    %574 = vmatmul.mubr.f32.gmra.mxu0 %v499
    %v575 = vpop.f32.mrf.mxu0
    %v576 = vadd.f32 %v493, %v575
    %v577 = vpop.f32.mrf.mxu0
    %578 = vmatprep.mubr.f32.mxu0 0.0
    %579 = vmatmul.mubr.f32.gmra.mxu0 %v502
    %v580 = vpop.f32.mrf.mxu0
    %v581 = vadd.f32 %v493, %v580
    %v582 = vpop.f32.mrf.mxu0
    %583 = vdwg.mxu0
    %v584 = vmax.f32 %v571, 0.0
    %v585 = vmax.f32 %v576, 0.0
    %v586 = vmax.f32 %v581, 0.0
    %v587 = vld [vmem:[%s6] sm:$0xff]
    %v588 = vld [vmem:[%s6 + $0x8] sm:$0xff]
    %v589 = vld [vmem:[%s6 + $0x10] sm:$0xff]
    %v590 = vld [vmem:[%s6 + $0x18] sm:$0xff]
    %v591 = vld [vmem:[%s6 + $0x20] sm:$0xff]
    %v592 = vld [vmem:[%s6 + $0x28] sm:$0xff]
    %v593 = vld [vmem:[%s6 + $0x30] sm:$0xff]
    %v594 = vld [vmem:[%s6 + $0x38] sm:$0xff]
    %v595 = vlaneseq
    %v596 = vshrl.u32 %v595, 7
    %v597 = vsub.s32 1, %v596
    %v598 = vrot.slane %v395, %v597
    %vm599 = vcmask 523264
    %v601 = vsel %vm599, %v584, 0
    %v604 = vsel %vm599, %v585, 0
    %v607 = vsel %vm599, %v586, 0
    %609 = vmatprep.subr.mxu0 0.0
    %610 = vmatpush1.msra.mxu0 0.0
    %611 = vmatprep.subr.mxu0 0.0
    %612 = vmatpush1.msra.mxu0 0.0
    %613 = vmatprep.subr.mxu0 0.0
    %614 = vmatpush1.msra.mxu0 0.0
    %615 = vmatprep.subr.mxu0 0.0
    %616 = vmatpush1.msra.mxu0 0.0
    %617 = vmatprep.subr.mxu0 0.0
    %618 = vmatpush1.msra.mxu0 0.0
    %619 = vmatprep.subr.mxu0 0.0
    %620 = vmatpush1.msra.mxu0 0.0
    %621 = vmatprep.subr.mxu0 0.0
    %622 = vmatpush1.msra.mxu0 0.0
    %623 = vmatprep.subr.mxu0 0.0
    %624 = vmatpush1.msra.mxu0 0.0
    %625 = vmatprep.subr.mxu0 0.0
    %626 = vmatpush1.msra.mxu0 %v594
    %627 = vmatprep.subr.mxu0 0.0
    %628 = vmatpush1.msra.mxu0 %v593
    %629 = vmatprep.subr.mxu0 0.0
    %630 = vmatpush1.msra.mxu0 %v592
    %631 = vmatprep.subr.mxu0 0.0
    %632 = vmatpush1.msra.mxu0 %v591
    %633 = vmatprep.subr.mxu0 0.0
    %634 = vmatpush1.msra.mxu0 %v590
    %635 = vmatprep.subr.mxu0 0.0
    %636 = vmatpush1.msra.mxu0 %v589
    %637 = vmatprep.subr.mxu0 0.0
    %638 = vmatpush1.msra.mxu0 %v588
    %639 = vmatprep.subr.mxu0 0.0
    %640 = vmatpush1.msra.mxu0 %v587
    %641 = vmatprep.subr.mxu0 0.0
    %642 = vmatpush2.msra.mxu0 0.0
    %643 = vmatprep.subr.mxu0 0.0
    %644 = vmatpush2.msra.mxu0 0.0
    %645 = vmatprep.subr.mxu0 0.0
    %646 = vmatpush2.msra.mxu0 0.0
    %647 = vmatprep.subr.mxu0 0.0
    %648 = vmatpush2.msra.mxu0 0.0
    %649 = vmatprep.subr.mxu0 0.0
    %650 = vmatpush2.msra.mxu0 0.0
    %651 = vmatprep.subr.mxu0 0.0
    %652 = vmatpush2.msra.mxu0 0.0
    %653 = vmatprep.subr.mxu0 0.0
    %654 = vmatpush2.msra.mxu0 0.0
    %655 = vmatprep.subr.mxu0 0.0
    %656 = vmatpush2.msra.mxu0 0.0
    %657 = vmatprep.subr.mxu0 0.0
    %658 = vmatpush2.msra.mxu0 0.0
    %659 = vmatprep.subr.mxu0 0.0
    %660 = vmatpush2.msra.mxu0 0.0
    %661 = vmatprep.subr.mxu0 0.0
    %662 = vmatpush2.msra.mxu0 0.0
    %663 = vmatprep.subr.mxu0 0.0
    %664 = vmatpush2.msra.mxu0 0.0
    %665 = vmatprep.subr.mxu0 0.0
    %666 = vmatpush2.msra.mxu0 0.0
    %667 = vmatprep.subr.mxu0 0.0
    %668 = vmatpush2.msra.mxu0 0.0
    %669 = vmatprep.subr.mxu0 0.0
    %670 = vmatpush2.msra.mxu0 0.0
    %671 = vmatprep.subr.mxu0 0.0
    %672 = vmatpush2.msra.mxu0 0.0
    %673 = vmatprep.mubr.f32.mxu0 0.0
    %674 = vmatmul.mubr.f32.gmra.mxu0 %v601
    %v675 = vpop.f32.mrf.mxu0
    %v676 = vadd.f32 %v598, %v675
    %v677 = vpop.f32.mrf.mxu0
    %678 = vmatprep.mubr.f32.mxu0 0.0
    %679 = vmatmul.mubr.f32.gmra.mxu0 %v604
    %v680 = vpop.f32.mrf.mxu0
    %v681 = vadd.f32 %v598, %v680
    %v682 = vpop.f32.mrf.mxu0
    %683 = vmatprep.mubr.f32.mxu0 0.0
    %684 = vmatmul.mubr.f32.gmra.mxu0 %v607
    %v685 = vpop.f32.mrf.mxu0
    %v686 = vadd.f32 %v598, %v685
    %v687 = vpop.f32.mrf.mxu0
    %688 = vdwg.mxu0
    %v689 = vmax.f32 %v676, 0.0
    %v690 = vmax.f32 %v681, 0.0
    %v691 = vmax.f32 %v686, 0.0
    %s692 = scalar_lea.vmem %s7, 2
    %v693 = vld [vmem:[%s692] sm:$0x3]
    %694 = vmatprep.subr.mxu0 0.0
    %695 = vmatpush1.msra.mxu0 0.0
    %696 = vmatprep.subr.mxu0 0.0
    %697 = vmatpush1.msra.mxu0 0.0
    %698 = vmatprep.subr.mxu0 0.0
    %699 = vmatpush1.msra.mxu0 0.0
    %700 = vmatprep.subr.mxu0 0.0
    %701 = vmatpush1.msra.mxu0 0.0
    %702 = vmatprep.subr.mxu0 0.0
    %703 = vmatpush1.msra.mxu0 0.0
    %704 = vmatprep.subr.mxu0 0.0
    %705 = vmatpush1.msra.mxu0 0.0
    %706 = vmatprep.subr.mxu0 0.0
    %707 = vmatpush1.msra.mxu0 0.0
    %708 = vmatprep.subr.mxu0 0.0
    %709 = vmatpush1.msra.mxu0 0.0
    %710 = vmatprep.subr.mxu0 0.0
    %711 = vmatpush1.msra.mxu0 0.0
    %712 = vmatprep.subr.mxu0 0.0
    %713 = vmatpush1.msra.mxu0 0.0
    %714 = vmatprep.subr.mxu0 0.0
    %715 = vmatpush1.msra.mxu0 0.0
    %716 = vmatprep.subr.mxu0 0.0
    %717 = vmatpush1.msra.mxu0 0.0
    %718 = vmatprep.subr.mxu0 0.0
    %719 = vmatpush1.msra.mxu0 0.0
    %720 = vmatprep.subr.mxu0 0.0
    %721 = vmatpush1.msra.mxu0 %v691
    %722 = vmatprep.subr.mxu0 0.0
    %723 = vmatpush1.msra.mxu0 %v690
    %724 = vmatprep.subr.mxu0 0.0
    %725 = vmatpush1.msra.mxu0 %v689
    %726 = vmatprep.subr.mxu0 0.0
    %727 = vmatpush2.msra.mxu0 0.0
    %728 = vmatprep.subr.mxu0 0.0
    %729 = vmatpush2.msra.mxu0 0.0
    %730 = vmatprep.subr.mxu0 0.0
    %731 = vmatpush2.msra.mxu0 0.0
    %732 = vmatprep.subr.mxu0 0.0
    %733 = vmatpush2.msra.mxu0 0.0
    %734 = vmatprep.subr.mxu0 0.0
    %735 = vmatpush2.msra.mxu0 0.0
    %736 = vmatprep.subr.mxu0 0.0
    %737 = vmatpush2.msra.mxu0 0.0
    %738 = vmatprep.subr.mxu0 0.0
    %739 = vmatpush2.msra.mxu0 0.0
    %740 = vmatprep.subr.mxu0 0.0
    %741 = vmatpush2.msra.mxu0 0.0
    %742 = vmatprep.subr.mxu0 0.0
    %743 = vmatpush2.msra.mxu0 0.0
    %744 = vmatprep.subr.mxu0 0.0
    %745 = vmatpush2.msra.mxu0 0.0
    %746 = vmatprep.subr.mxu0 0.0
    %747 = vmatpush2.msra.mxu0 0.0
    %748 = vmatprep.subr.mxu0 0.0
    %749 = vmatpush2.msra.mxu0 0.0
    %750 = vmatprep.subr.mxu0 0.0
    %751 = vmatpush2.msra.mxu0 0.0
    %752 = vmatprep.subr.mxu0 0.0
    %753 = vmatpush2.msra.mxu0 0.0
    %754 = vmatprep.subr.mxu0 0.0
    %755 = vmatpush2.msra.mxu0 0.0
    %756 = vmatprep.subr.mxu0 0.0
    %757 = vmatpush2.msra.mxu0 0.0
    %758 = vmatprep.mubr.f32.mxu0 0.0
    %759 = vmatmul.mubr.f32.gmra.mxu0 %v398
    %v760 = vpop.f32.mrf.mxu0
    %v761 = vadd.f32 %v379, %v760
    %v762 = vpop.f32.mrf.mxu0
    %763 = vmatprep.mubr.f32.mxu0 0.0
    %764 = vmatmul.mubr.f32.gmra.mxu0 %v401
    %v765 = vpop.f32.mrf.mxu0
    %v766 = vadd.f32 %v384, %v765
    %v767 = vpop.f32.mrf.mxu0
    %768 = vmatprep.mubr.f32.mxu0 0.0
    %769 = vmatmul.mubr.f32.gmra.mxu0 %v404
    %v770 = vpop.f32.mrf.mxu0
    %v771 = vadd.f32 %v389, %v770
    %v772 = vpop.f32.mrf.mxu0
    %773 = vdwg.mxu0
    %s774 = scalar_lea.vmem %s5, 32
    %v775 = vld [vmem:[%s774] sm:$0xff]
    %v776 = vld [vmem:[%s774 + $0x8] sm:$0xff]
    %v777 = vld [vmem:[%s774 + $0x10] sm:$0xff]
    %v778 = vld [vmem:[%s774 + $0x18] sm:$0xff]
    %v779 = vlaneseq
    %v780 = vshrl.u32 %v779, 7
    %v781 = vsub.s32 0, %v780
    %v782 = vrot.slane %v693, %v781
    %v784 = vsel %vm494, %v761, 0
    %v787 = vsel %vm494, %v766, 0
    %v790 = vsel %vm494, %v771, 0
    %792 = vmatprep.subr.mxu0 0.0
    %793 = vmatpush1.msra.mxu0 0.0
    %794 = vmatprep.subr.mxu0 0.0
    %795 = vmatpush1.msra.mxu0 0.0
    %796 = vmatprep.subr.mxu0 0.0
    %797 = vmatpush1.msra.mxu0 0.0
    %798 = vmatprep.subr.mxu0 0.0
    %799 = vmatpush1.msra.mxu0 0.0
    %800 = vmatprep.subr.mxu0 0.0
    %801 = vmatpush1.msra.mxu0 0.0
    %802 = vmatprep.subr.mxu0 0.0
    %803 = vmatpush1.msra.mxu0 0.0
    %804 = vmatprep.subr.mxu0 0.0
    %805 = vmatpush1.msra.mxu0 0.0
    %806 = vmatprep.subr.mxu0 0.0
    %807 = vmatpush1.msra.mxu0 0.0
    %808 = vmatprep.subr.mxu0 0.0
    %809 = vmatpush1.msra.mxu0 0.0
    %810 = vmatprep.subr.mxu0 0.0
    %811 = vmatpush1.msra.mxu0 0.0
    %812 = vmatprep.subr.mxu0 0.0
    %813 = vmatpush1.msra.mxu0 0.0
    %814 = vmatprep.subr.mxu0 0.0
    %815 = vmatpush1.msra.mxu0 0.0
    %816 = vmatprep.subr.mxu0 0.0
    %817 = vmatpush1.msra.mxu0 %v778
    %818 = vmatprep.subr.mxu0 0.0
    %819 = vmatpush1.msra.mxu0 %v777
    %820 = vmatprep.subr.mxu0 0.0
    %821 = vmatpush1.msra.mxu0 %v776
    %822 = vmatprep.subr.mxu0 0.0
    %823 = vmatpush1.msra.mxu0 %v775
    %824 = vmatprep.subr.mxu0 0.0
    %825 = vmatpush2.msra.mxu0 0.0
    %826 = vmatprep.subr.mxu0 0.0
    %827 = vmatpush2.msra.mxu0 0.0
    %828 = vmatprep.subr.mxu0 0.0
    %829 = vmatpush2.msra.mxu0 0.0
    %830 = vmatprep.subr.mxu0 0.0
    %831 = vmatpush2.msra.mxu0 0.0
    %832 = vmatprep.subr.mxu0 0.0
    %833 = vmatpush2.msra.mxu0 0.0
    %834 = vmatprep.subr.mxu0 0.0
    %835 = vmatpush2.msra.mxu0 0.0
    %836 = vmatprep.subr.mxu0 0.0
    %837 = vmatpush2.msra.mxu0 0.0
    %838 = vmatprep.subr.mxu0 0.0
    %839 = vmatpush2.msra.mxu0 0.0
    %840 = vmatprep.subr.mxu0 0.0
    %841 = vmatpush2.msra.mxu0 0.0
    %842 = vmatprep.subr.mxu0 0.0
    %843 = vmatpush2.msra.mxu0 0.0
    %844 = vmatprep.subr.mxu0 0.0
    %845 = vmatpush2.msra.mxu0 0.0
    %846 = vmatprep.subr.mxu0 0.0
    %847 = vmatpush2.msra.mxu0 0.0
    %848 = vmatprep.subr.mxu0 0.0
    %849 = vmatpush2.msra.mxu0 0.0
    %850 = vmatprep.subr.mxu0 0.0
    %851 = vmatpush2.msra.mxu0 0.0
    %852 = vmatprep.subr.mxu0 0.0
    %853 = vmatpush2.msra.mxu0 0.0
    %854 = vmatprep.subr.mxu0 0.0
    %855 = vmatpush2.msra.mxu0 0.0
    %856 = vmatprep.mubr.f32.mxu0 0.0
    %857 = vmatmul.mubr.f32.gmra.mxu0 %v784
    %v858 = vpop.f32.mrf.mxu0
    %v859 = vadd.f32 %v782, %v858
    %v860 = vpop.f32.mrf.mxu0
    %861 = vmatprep.mubr.f32.mxu0 0.0
    %862 = vmatmul.mubr.f32.gmra.mxu0 %v787
    %v863 = vpop.f32.mrf.mxu0
    %v864 = vadd.f32 %v782, %v863
    %v865 = vpop.f32.mrf.mxu0
    %866 = vmatprep.mubr.f32.mxu0 0.0
    %867 = vmatmul.mubr.f32.gmra.mxu0 %v790
    %v868 = vpop.f32.mrf.mxu0
    %v869 = vadd.f32 %v782, %v868
    %v870 = vpop.f32.mrf.mxu0
    %871 = vdwg.mxu0
    %v872 = vmax.f32 %v859, 0.0
    %v873 = vmax.f32 %v864, 0.0
    %v874 = vmax.f32 %v869, 0.0
    %s875 = scalar_lea.vmem %s6, 64
    %v876 = vld [vmem:[%s875] sm:$0xff]
    %v877 = vld [vmem:[%s875 + $0x8] sm:$0xff]
    %v878 = vld [vmem:[%s875 + $0x10] sm:$0xff]
    %v879 = vld [vmem:[%s875 + $0x18] sm:$0xff]
    %v880 = vld [vmem:[%s875 + $0x20] sm:$0xff]
    %v881 = vld [vmem:[%s875 + $0x28] sm:$0xff]
    %v882 = vld [vmem:[%s875 + $0x30] sm:$0xff]
    %v883 = vld [vmem:[%s875 + $0x38] sm:$0xff]
    %v884 = vlaneseq
    %v885 = vshrl.u32 %v884, 7
    %v886 = vsub.s32 1, %v885
    %v887 = vrot.slane %v693, %v886
    %v889 = vsel %vm599, %v872, 0
    %v892 = vsel %vm599, %v873, 0
    %v895 = vsel %vm599, %v874, 0
    %897 = vmatprep.subr.mxu0 0.0
    %898 = vmatpush1.msra.mxu0 0.0
    %899 = vmatprep.subr.mxu0 0.0
    %900 = vmatpush1.msra.mxu0 0.0
    %901 = vmatprep.subr.mxu0 0.0
    %902 = vmatpush1.msra.mxu0 0.0
    %903 = vmatprep.subr.mxu0 0.0
    %904 = vmatpush1.msra.mxu0 0.0
    %905 = vmatprep.subr.mxu0 0.0
    %906 = vmatpush1.msra.mxu0 0.0
    %907 = vmatprep.subr.mxu0 0.0
    %908 = vmatpush1.msra.mxu0 0.0
    %909 = vmatprep.subr.mxu0 0.0
    %910 = vmatpush1.msra.mxu0 0.0
    %911 = vmatprep.subr.mxu0 0.0
    %912 = vmatpush1.msra.mxu0 0.0
    %913 = vmatprep.subr.mxu0 0.0
    %914 = vmatpush1.msra.mxu0 %v883
    %915 = vmatprep.subr.mxu0 0.0
    %916 = vmatpush1.msra.mxu0 %v882
    %917 = vmatprep.subr.mxu0 0.0
    %918 = vmatpush1.msra.mxu0 %v881
    %919 = vmatprep.subr.mxu0 0.0
    %920 = vmatpush1.msra.mxu0 %v880
    %921 = vmatprep.subr.mxu0 0.0
    %922 = vmatpush1.msra.mxu0 %v879
    %923 = vmatprep.subr.mxu0 0.0
    %924 = vmatpush1.msra.mxu0 %v878
    %925 = vmatprep.subr.mxu0 0.0
    %926 = vmatpush1.msra.mxu0 %v877
    %927 = vmatprep.subr.mxu0 0.0
    %928 = vmatpush1.msra.mxu0 %v876
    %929 = vmatprep.subr.mxu0 0.0
    %930 = vmatpush2.msra.mxu0 0.0
    %931 = vmatprep.subr.mxu0 0.0
    %932 = vmatpush2.msra.mxu0 0.0
    %933 = vmatprep.subr.mxu0 0.0
    %934 = vmatpush2.msra.mxu0 0.0
    %935 = vmatprep.subr.mxu0 0.0
    %936 = vmatpush2.msra.mxu0 0.0
    %937 = vmatprep.subr.mxu0 0.0
    %938 = vmatpush2.msra.mxu0 0.0
    %939 = vmatprep.subr.mxu0 0.0
    %940 = vmatpush2.msra.mxu0 0.0
    %941 = vmatprep.subr.mxu0 0.0
    %942 = vmatpush2.msra.mxu0 0.0
    %943 = vmatprep.subr.mxu0 0.0
    %944 = vmatpush2.msra.mxu0 0.0
    %945 = vmatprep.subr.mxu0 0.0
    %946 = vmatpush2.msra.mxu0 0.0
    %947 = vmatprep.subr.mxu0 0.0
    %948 = vmatpush2.msra.mxu0 0.0
    %949 = vmatprep.subr.mxu0 0.0
    %950 = vmatpush2.msra.mxu0 0.0
    %951 = vmatprep.subr.mxu0 0.0
    %952 = vmatpush2.msra.mxu0 0.0
    %953 = vmatprep.subr.mxu0 0.0
    %954 = vmatpush2.msra.mxu0 0.0
    %955 = vmatprep.subr.mxu0 0.0
    %956 = vmatpush2.msra.mxu0 0.0
    %957 = vmatprep.subr.mxu0 0.0
    %958 = vmatpush2.msra.mxu0 0.0
    %959 = vmatprep.subr.mxu0 0.0
    %960 = vmatpush2.msra.mxu0 0.0
    %961 = vmatprep.mubr.f32.mxu0 0.0
    %962 = vmatmul.mubr.f32.gmra.mxu0 %v889
    %v963 = vpop.f32.mrf.mxu0
    %v964 = vadd.f32 %v887, %v963
    %v965 = vpop.f32.mrf.mxu0
    %966 = vmatprep.mubr.f32.mxu0 0.0
    %967 = vmatmul.mubr.f32.gmra.mxu0 %v892
    %v968 = vpop.f32.mrf.mxu0
    %v969 = vadd.f32 %v887, %v968
    %v970 = vpop.f32.mrf.mxu0
    %971 = vmatprep.mubr.f32.mxu0 0.0
    %972 = vmatmul.mubr.f32.gmra.mxu0 %v895
    %v973 = vpop.f32.mrf.mxu0
    %v974 = vadd.f32 %v887, %v973
    %v975 = vpop.f32.mrf.mxu0
    %976 = vdwg.mxu0
    %v977 = vld [vmem:[%s2] sm:$0x1]
    %v978 = vlaneseq
    %v979 = vshrl.u32 %v978, 7
    %v980 = vsub.s32 0, %v979
    %v981 = vrot.slane %v977, %v980
    %vm982 = vcmp.eq.s32.totalorder %v97, %v981
    %v983 = vsel %vm982, 1, 0
    %v984 = vcvt.s32.f32 %v983
    %v985 = vsel %vm396, %v984, 0.0
    %986 = vadd.xlane.f32.xlu0 %v985
    %v987 = vpop.xlane.xlu0 %986
    %v988 = vmax.f32 %v987, 1.0
    %v990 = vsel %vm396, %v984, 0
    %992 = vmatprep.subr.mxu0 0.0
    %993 = vmatpush1.msra.mxu0 0.0
    %994 = vmatprep.subr.mxu0 0.0
    %995 = vmatpush1.msra.mxu0 0.0
    %996 = vmatprep.subr.mxu0 0.0
    %997 = vmatpush1.msra.mxu0 0.0
    %998 = vmatprep.subr.mxu0 0.0
    %999 = vmatpush1.msra.mxu0 0.0
    %1000 = vmatprep.subr.mxu0 0.0
    %1001 = vmatpush1.msra.mxu0 0.0
    %1002 = vmatprep.subr.mxu0 0.0
    %1003 = vmatpush1.msra.mxu0 0.0
    %1004 = vmatprep.subr.mxu0 0.0
    %1005 = vmatpush1.msra.mxu0 0.0
    %1006 = vmatprep.subr.mxu0 0.0
    %1007 = vmatpush1.msra.mxu0 0.0
    %1008 = vmatprep.subr.mxu0 0.0
    %1009 = vmatpush1.msra.mxu0 0.0
    %1010 = vmatprep.subr.mxu0 0.0
    %1011 = vmatpush1.msra.mxu0 0.0
    %1012 = vmatprep.subr.mxu0 0.0
    %1013 = vmatpush1.msra.mxu0 0.0
    %1014 = vmatprep.subr.mxu0 0.0
    %1015 = vmatpush1.msra.mxu0 0.0
    %1016 = vmatprep.subr.mxu0 0.0
    %1017 = vmatpush1.msra.mxu0 0.0
    %1018 = vmatprep.subr.mxu0 0.0
    %1019 = vmatpush1.msra.mxu0 %v974
    %1020 = vmatprep.subr.mxu0 0.0
    %1021 = vmatpush1.msra.mxu0 %v969
    %1022 = vmatprep.subr.mxu0 0.0
    %1023 = vmatpush1.msra.mxu0 %v964
    %1024 = vmatprep.subr.mxu0 0.0
    %1025 = vmatpush2.msra.mxu0 0.0
    %1026 = vmatprep.subr.mxu0 0.0
    %1027 = vmatpush2.msra.mxu0 0.0
    %1028 = vmatprep.subr.mxu0 0.0
    %1029 = vmatpush2.msra.mxu0 0.0
    %1030 = vmatprep.subr.mxu0 0.0
    %1031 = vmatpush2.msra.mxu0 0.0
    %1032 = vmatprep.subr.mxu0 0.0
    %1033 = vmatpush2.msra.mxu0 0.0
    %1034 = vmatprep.subr.mxu0 0.0
    %1035 = vmatpush2.msra.mxu0 0.0
    %1036 = vmatprep.subr.mxu0 0.0
    %1037 = vmatpush2.msra.mxu0 0.0
    %1038 = vmatprep.subr.mxu0 0.0
    %1039 = vmatpush2.msra.mxu0 0.0
    %1040 = vmatprep.subr.mxu0 0.0
    %1041 = vmatpush2.msra.mxu0 0.0
    %1042 = vmatprep.subr.mxu0 0.0
    %1043 = vmatpush2.msra.mxu0 0.0
    %1044 = vmatprep.subr.mxu0 0.0
    %1045 = vmatpush2.msra.mxu0 0.0
    %1046 = vmatprep.subr.mxu0 0.0
    %1047 = vmatpush2.msra.mxu0 0.0
    %1048 = vmatprep.subr.mxu0 0.0
    %1049 = vmatpush2.msra.mxu0 0.0
    %1050 = vmatprep.subr.mxu0 0.0
    %1051 = vmatpush2.msra.mxu0 0.0
    %1052 = vmatprep.subr.mxu0 0.0
    %1053 = vmatpush2.msra.mxu0 0.0
    %1054 = vmatprep.subr.mxu0 0.0
    %1055 = vmatpush2.msra.mxu0 0.0
    %1056 = vmatprep.mubr.f32.mxu0 0.0
    %1057 = vmatmul.mubr.f32.gmra.mxu0 %v990
    %v1058 = vpop.f32.mrf.mxu0
    %v1059 = vadd.f32 0.0, %v1058
    %v1060 = vpop.f32.mrf.mxu0
    %1061 = vdwg.mxu0
    %v1062 = vrcp.pop %v988
    %v1063 = vmul.f32 %v1059, %v1062
    %1064 = vst.msk [vmem:[#allocation2] sm:$0xff] %vm494, %v1063
    // Predicated region
    $region34: #{tpu_custom_call.1} parent=1 // pred_check
      _
    $region35: #{tpu_custom_call.1} parent=1 // pred_check_branch
      %1066 = sbr.rel (0) target = $region37
    $region36: #{tpu_custom_call.1} parent=1 // pred_region
      %s1068 = ssub.s32 128, 128
      %1069 = vsyncadd [#allocation3], %s1068
      %s1071 = sshll.u32 [#allocation2], 4
      %s1072 = int_to_ptr.vmem [resolvable:$true] %s1071
      %1074 = dma.vmem_to_hbm [thread:$0]  %s1072, 128, %s8, [#allocation3]
    $region37: #{tpu_custom_call.1} parent=1 // pred_fallthru
      _
    // Predicated region
    $region38: #{tpu_custom_call.1} parent=1 // pred_check
      _
    $region39: #{tpu_custom_call.1} parent=1 // pred_check_branch
      %1076 = sbr.rel (0) target = $region41
    $region40: #{tpu_custom_call.1} parent=1 // pred_region
      %1077 = dma.done [#allocation3], 128
    $region41: #{tpu_custom_call.1} parent=1 // pred_fallthru
      _
    %1078 = vsyncpa [#allocation3], 1

</llo_original>
